<compile_context>
chip_gen: v7x
topology: tpu7x:2x2x1
jax: 0.10.0
libtpu: 0.0.40
codegen_flags: <defaults>
</compile_context>

<pallas_src>
import numpy as np

import jax
import jax.numpy as jnp
from jax.experimental import pallas as pl
from jax.experimental.pallas import tpu as pltpu

_LANE = 128
_SUBLANE = 8
_MAX_TILE_ROWS = 4096          # (4096, 128) f32 = 2 MiB per input per pipeline buffer
_MIN_ROWS_PER_SLICE = 512      # engage the 2nd TensorCore above ~128K elements


def _cdiv(a, b):
    return -(-a // b)


def _round_up(a, b):
    return _cdiv(a, b) * b


def _row_align(*dtypes):
    """Sublane multiple of the packed native tile for these dtypes."""
    align = _SUBLANE
    for dt in dtypes:
        packing = max(1, 4 // np.dtype(dt).itemsize)   # f32:1, bf16:2, int8/bool:4
        align = max(align, _SUBLANE * packing)
    return align


def _make_dice_kernel(steps, tile_rows, n_valid):
    """Kernel accumulating sum(sigmoid(x)*t) and sum(sigmoid(x)+t) per slice."""
    tile_elems = tile_rows * _LANE

    def kernel(x_ref, t_ref, inter_out_ref, sum_out_ref, acc_inter, acc_sum):
        i = pl.program_id(0)   # slice (TensorCore) index
        j = pl.program_id(1)   # step within the slice

        @pl.when(j == 0)
        def _():
            acc_inter[...] = jnp.zeros_like(acc_inter)
            acc_sum[...] = jnp.zeros_like(acc_sum)

        block = i * steps + j
        block_start = block * tile_elems              # element offset of this tile
        is_full = (block_start + tile_elems) <= n_valid

        def accumulate(apply_mask):
            x = x_ref[...].astype(jnp.float32)
            t = t_ref[...].astype(jnp.float32)
            # sigmoid via a single EUP push (tanh) instead of exp + reciprocal.
            s = 0.5 * (jnp.tanh(0.5 * x) + 1.0)
            st = s * t
            spt = s + t
            if apply_mask:
                row = jax.lax.broadcasted_iota(jnp.int32, (tile_rows, _LANE), 0)
                lane = jax.lax.broadcasted_iota(jnp.int32, (tile_rows, _LANE), 1)
                elem = block_start + row * _LANE + lane
                mask = elem < n_valid
                st = jnp.where(mask, st, 0.0)
                spt = jnp.where(mask, spt, 0.0)
            # Reduce straight down to one (8,128) vreg-tile of partials.
            acc_inter[...] += st.reshape(-1, _SUBLANE, _LANE).sum(axis=0)
            acc_sum[...] += spt.reshape(-1, _SUBLANE, _LANE).sum(axis=0)

        @pl.when(is_full)
        def _():
            accumulate(False)

        @pl.when(jnp.logical_not(is_full))
        def _():
            accumulate(True)

        @pl.when(j == pl.num_programs(1) - 1)
        def _():
            inter_out_ref[...] = acc_inter[...][None]
            sum_out_ref[...] = acc_sum[...][None]

    return kernel


def dice_loss(inputs, targets, smooth=0.1, *,
              max_tile_rows=_MAX_TILE_ROWS,
              min_rows_per_slice=_MIN_ROWS_PER_SLICE):
    """Pallas TPU implementation of DiceLoss.forward(inputs, targets, smooth)."""
    x = inputs.reshape(-1)
    t = targets.reshape(-1)
    n = int(x.shape[0])

    if n == 0:                      # dice == smooth/smooth == 1  ->  loss == 0
        return jnp.zeros((), jnp.float32)
    assert n < 2**31, "element indices are computed in int32 inside the kernel"

    # Inputs/targets stay in their native (possibly narrow) dtype; the kernel
    # upcasts on the VPU.  Row tile alignment follows the packed sublane tile.
    row_align = _row_align(x.dtype, t.dtype)

    rows = _cdiv(n, _LANE)
    n128 = rows * _LANE
    if n128 != n:
        # Only pad up to the next 128-lane row (<128 elements, rare); these
        # elements are excluded by the in-kernel mask as well.
        x = jnp.pad(x, (0, n128 - n))
        t = jnp.pad(t, (0, n128 - n))
    x2 = x.reshape(rows, _LANE)
    t2 = t.reshape(rows, _LANE)

    # Grid sizing: n_slices exposes both TensorCores (v7x), steps keeps each
    # block <= max_tile_rows, tile_rows is the minimal aligned tile covering
    # rows (grid over-read < row_align rows per block; garbage is masked).
    n_slices = 2 if rows >= 2 * min_rows_per_slice else 1
    steps = max(1, _cdiv(_cdiv(rows, n_slices), max_tile_rows))
    n_blocks = n_slices * steps
    tile_rows = _round_up(_cdiv(rows, n_blocks), row_align)
    # Never let a block start entirely past the array (keeps every DMA in bounds).
    while n_blocks > n_slices and (n_blocks - 1) * tile_rows >= rows:
        n_blocks -= n_slices
        steps = n_blocks // n_slices
        tile_rows = _round_up(_cdiv(rows, n_blocks), row_align)

    kernel = _make_dice_kernel(steps, tile_rows, n)

    in_map = lambda i, j: (i * steps + j, 0)
    out_map = lambda i, j: (i, 0, 0)

    bytes_accessed = int(x2.size * x2.dtype.itemsize
                         + t2.size * t2.dtype.itemsize
                         + 2 * n_slices * _SUBLANE * _LANE * 4)

    partial_inter, partial_sum = pl.pallas_call(
        kernel,
        out_shape=(
            jax.ShapeDtypeStruct((n_slices, _SUBLANE, _LANE), jnp.float32),
            jax.ShapeDtypeStruct((n_slices, _SUBLANE, _LANE), jnp.float32),
        ),
        grid_spec=pltpu.PrefetchScalarGridSpec(
            num_scalar_prefetch=0,
            grid=(n_slices, steps),
            in_specs=[
                pl.BlockSpec((tile_rows, _LANE), in_map),
                pl.BlockSpec((tile_rows, _LANE), in_map),
            ],
            out_specs=(
                pl.BlockSpec((1, _SUBLANE, _LANE), out_map),
                pl.BlockSpec((1, _SUBLANE, _LANE), out_map),
            ),
            scratch_shapes=[
                pltpu.VMEM((_SUBLANE, _LANE), jnp.float32),
                pltpu.VMEM((_SUBLANE, _LANE), jnp.float32),
            ],
        ),
        compiler_params=pltpu.CompilerParams(
            dimension_semantics=("parallel", "arbitrary"),
        ),
        cost_estimate=pl.CostEstimate(
            flops=6 * n, transcendentals=n, bytes_accessed=bytes_accessed),
    )(x2, t2)

    intersection = jnp.sum(partial_inter)
    s_plus_t = jnp.sum(partial_sum)
    dice = (2.0 * intersection + smooth) / (s_plus_t + smooth)
    return 1.0 - dice


def _reference(inputs, targets, smooth=0.1):
    """Float64 host reference of the PyTorch module."""
    x = np.asarray(inputs, dtype=np.float64).reshape(-1)
    t = np.asarray(targets, dtype=np.float64).reshape(-1)
    s = 1.0 / (1.0 + np.exp(-x))
    inter = float(np.sum(s * t))
    dice = (2.0 * inter + smooth) / (float(np.sum(s)) + float(np.sum(t)) + smooth)
    return 1.0 - dice


if __name__ == "__main__":
    key = jax.random.PRNGKey(0)

    # (shape, max_tile_rows override) — small cases covering the main paths:
    #   exact full tile / masked tail (numel % 128 != 0) / two slices x two steps.
    cases = [
        ((2, 4, 16, 16), None),
        ((2, 4, 15, 17), None),
        ((2, 4, 128, 128), 256),
    ]

    ok = True
    for idx, (shp, mtr) in enumerate(cases):
        k1, k2 = jax.random.split(jax.random.fold_in(key, idx))
        x = jax.random.normal(k1, shp, dtype=jnp.float32)
        y = (jax.random.uniform(k2, shp) > 0.5).astype(jnp.float32)
        kwargs = {} if mtr is None else {"max_tile_rows": mtr}
        loss = jax.block_until_ready(dice_loss(x, y, smooth=0.1, **kwargs))
        ref = _reference(x, y, smooth=0.1)
        if not np.allclose(float(loss), ref, rtol=1e-4, atol=1e-5):
            ok = False
            print(f"MISMATCH shape={shp}: kernel={float(loss)} ref={ref}")

    if ok:
        print("KERNEL_OK")
</pallas_src>

<mosaic_0001>
module attributes {stable_mosaic.version = 11 : i64} {
  func.func @kernel(%arg0: i32, %arg1: i32, %arg2: memref<16x128xf32, #tpu.memory_space<vmem>>, %arg3: memref<16x128xf32, #tpu.memory_space<vmem>>, %arg4: memref<1x8x128xf32, #tpu.memory_space<vmem>>, %arg5: memref<1x8x128xf32, #tpu.memory_space<vmem>>, %arg6: memref<8x128xf32, #tpu.memory_space<vmem>>, %arg7: memref<8x128xf32, #tpu.memory_space<vmem>>) attributes {dimension_semantics = [#tpu.dimension_semantics<parallel>, #tpu.dimension_semantics<arbitrary>], iteration_bounds = array<i64: 1, 1>, scalar_prefetch = 0 : i64, scratch_operands = 2 : i64, tpu.core_type = #tpu.core_type<tc>, window_params = [{transform_indices = @transform_0, window_bounds = array<i64: 16, 128>}, {transform_indices = @transform_1, window_bounds = array<i64: 16, 128>}, {transform_indices = @transform_2, window_bounds = array<i64: 1, 8, 128>}, {transform_indices = @transform_3, window_bounds = array<i64: 1, 8, 128>}]} {
    %c0_i32 = arith.constant 0 : i32
    %0 = arith.cmpi eq, %arg1, %c0_i32 : i32
    %1 = arith.extui %0 : i1 to i32
    %c0_i32_0 = arith.constant 0 : i32
    %2 = arith.cmpi ne, %1, %c0_i32_0 : i32
    scf.if %2 {
      %cst = arith.constant 0.000000e+00 : f32
      %16 = vector.broadcast %cst : f32 to vector<8x128xf32>
      %c0 = arith.constant 0 : index
      %c0_7 = arith.constant 0 : index
      %17 = vector.load %arg6[%c0, %c0_7] : memref<8x128xf32, #tpu.memory_space<vmem>>, vector<8x128xf32>
      tpu.vector_store %arg6[%c0, %c0_7], %16 {strides = array<i32>} : memref<8x128xf32, #tpu.memory_space<vmem>>, vector<8x128xf32>,
      %cst_8 = arith.constant 0.000000e+00 : f32
      %18 = vector.broadcast %cst_8 : f32 to vector<8x128xf32>
      %c0_9 = arith.constant 0 : index
      %c0_10 = arith.constant 0 : index
      %19 = vector.load %arg7[%c0_9, %c0_10] : memref<8x128xf32, #tpu.memory_space<vmem>>, vector<8x128xf32>
      tpu.vector_store %arg7[%c0_9, %c0_10], %18 {strides = array<i32>} : memref<8x128xf32, #tpu.memory_space<vmem>>, vector<8x128xf32>,
    } else {
    }
    %c1_i32 = arith.constant 1 : i32
    %3 = arith.muli %arg0, %c1_i32 : i32
    %4 = arith.addi %3, %arg1 : i32
    %c2048_i32 = arith.constant 2048 : i32
    %5 = arith.muli %4, %c2048_i32 : i32
    %c2048_i32_1 = arith.constant 2048 : i32
    %6 = arith.addi %5, %c2048_i32_1 : i32
    %c2048_i32_2 = arith.constant 2048 : i32
    %7 = arith.cmpi sle, %6, %c2048_i32_2 : i32
    %8 = arith.extui %7 : i1 to i32
    %c0_i32_3 = arith.constant 0 : i32
    %9 = arith.cmpi ne, %8, %c0_i32_3 : i32
    scf.if %9 {
      %c0 = arith.constant 0 : index
      %c0_7 = arith.constant 0 : index
      %16 = vector.load %arg2[%c0, %c0_7] : memref<16x128xf32, #tpu.memory_space<vmem>>, vector<16x128xf32>
      %c0_8 = arith.constant 0 : index
      %c0_9 = arith.constant 0 : index
      %17 = vector.load %arg3[%c0_8, %c0_9] : memref<16x128xf32, #tpu.memory_space<vmem>>, vector<16x128xf32>
      %cst = arith.constant 5.000000e-01 : f32
      %18 = vector.broadcast %cst : f32 to vector<16x128xf32>
      %19 = arith.mulf %18, %16 : vector<16x128xf32>
      %20 = math.tanh %19 : vector<16x128xf32>
      %cst_10 = arith.constant 1.000000e+00 : f32
      %21 = vector.broadcast %cst_10 : f32 to vector<16x128xf32>
      %22 = arith.addf %20, %21 : vector<16x128xf32>
      %cst_11 = arith.constant 5.000000e-01 : f32
      %23 = vector.broadcast %cst_11 : f32 to vector<16x128xf32>
      %24 = arith.mulf %23, %22 : vector<16x128xf32>
      %25 = arith.mulf %24, %17 : vector<16x128xf32>
      %26 = arith.addf %24, %17 : vector<16x128xf32>
      %c0_12 = arith.constant 0 : index
      %c0_13 = arith.constant 0 : index
      %27 = vector.load %arg6[%c0_12, %c0_13] : memref<8x128xf32, #tpu.memory_space<vmem>>, vector<8x128xf32>
      %28 = vector.shape_cast %25 : vector<16x128xf32> to vector<2x8x128xf32>
      %cst_14 = arith.constant dense<0.000000e+00> : vector<8x128xf32>
      %29 = vector.multi_reduction <add>, %28, %cst_14 [0] : vector<2x8x128xf32> to vector<8x128xf32>
      %30 = arith.addf %27, %29 : vector<8x128xf32>
      %c0_15 = arith.constant 0 : index
      %c0_16 = arith.constant 0 : index
      %31 = vector.load %arg6[%c0_15, %c0_16] : memref<8x128xf32, #tpu.memory_space<vmem>>, vector<8x128xf32>
      tpu.vector_store %arg6[%c0_15, %c0_16], %30 {strides = array<i32>} : memref<8x128xf32, #tpu.memory_space<vmem>>, vector<8x128xf32>,
      %c0_17 = arith.constant 0 : index
      %c0_18 = arith.constant 0 : index
      %32 = vector.load %arg7[%c0_17, %c0_18] : memref<8x128xf32, #tpu.memory_space<vmem>>, vector<8x128xf32>
      %33 = vector.shape_cast %26 : vector<16x128xf32> to vector<2x8x128xf32>
      %cst_19 = arith.constant dense<0.000000e+00> : vector<8x128xf32>
      %34 = vector.multi_reduction <add>, %33, %cst_19 [0] : vector<2x8x128xf32> to vector<8x128xf32>
      %35 = arith.addf %32, %34 : vector<8x128xf32>
      %c0_20 = arith.constant 0 : index
      %c0_21 = arith.constant 0 : index
      %36 = vector.load %arg7[%c0_20, %c0_21] : memref<8x128xf32, #tpu.memory_space<vmem>>, vector<8x128xf32>
      tpu.vector_store %arg7[%c0_20, %c0_21], %35 {strides = array<i32>} : memref<8x128xf32, #tpu.memory_space<vmem>>, vector<8x128xf32>,
    } else {
    }
    %true = arith.constant true
    %10 = arith.xori %7, %true : i1
    %11 = arith.extui %10 : i1 to i32
    %c0_i32_4 = arith.constant 0 : i32
    %12 = arith.cmpi ne, %11, %c0_i32_4 : i32
    scf.if %12 {
      %c0 = arith.constant 0 : index
      %c0_7 = arith.constant 0 : index
      %16 = vector.load %arg2[%c0, %c0_7] : memref<16x128xf32, #tpu.memory_space<vmem>>, vector<16x128xf32>
      %c0_8 = arith.constant 0 : index
      %c0_9 = arith.constant 0 : index
      %17 = vector.load %arg3[%c0_8, %c0_9] : memref<16x128xf32, #tpu.memory_space<vmem>>, vector<16x128xf32>
      %cst = arith.constant 5.000000e-01 : f32
      %18 = vector.broadcast %cst : f32 to vector<16x128xf32>
      %19 = arith.mulf %18, %16 : vector<16x128xf32>
      %20 = math.tanh %19 : vector<16x128xf32>
      %cst_10 = arith.constant 1.000000e+00 : f32
      %21 = vector.broadcast %cst_10 : f32 to vector<16x128xf32>
      %22 = arith.addf %20, %21 : vector<16x128xf32>
      %cst_11 = arith.constant 5.000000e-01 : f32
      %23 = vector.broadcast %cst_11 : f32 to vector<16x128xf32>
      %24 = arith.mulf %23, %22 : vector<16x128xf32>
      %25 = arith.mulf %24, %17 : vector<16x128xf32>
      %26 = arith.addf %24, %17 : vector<16x128xf32>
      %27 = tpu.iota {dimensions = array<i32: 0>} : vector<16x128xi32>
      %28 = tpu.iota {dimensions = array<i32: 1>} : vector<16x128xi32>
      %c128_i32 = arith.constant 128 : i32
      %29 = vector.broadcast %c128_i32 : i32 to vector<16x128xi32>
      %30 = arith.muli %27, %29 : vector<16x128xi32>
      %31 = vector.broadcast %5 : i32 to vector<16x128xi32>
      %32 = arith.addi %31, %30 : vector<16x128xi32>
      %33 = arith.addi %32, %28 : vector<16x128xi32>
      %c2048_i32_12 = arith.constant 2048 : i32
      %34 = vector.broadcast %c2048_i32_12 : i32 to vector<16x128xi32>
      %35 = arith.cmpi slt, %33, %34 : vector<16x128xi32>
      %cst_13 = arith.constant 0.000000e+00 : f32
      %36 = vector.broadcast %cst_13 : f32 to vector<16x128xf32>
      %37 = arith.select %35, %25, %36 : vector<16x128xi1>, vector<16x128xf32>
      %cst_14 = arith.constant 0.000000e+00 : f32
      %38 = vector.broadcast %cst_14 : f32 to vector<16x128xf32>
      %39 = arith.select %35, %26, %38 : vector<16x128xi1>, vector<16x128xf32>
      %c0_15 = arith.constant 0 : index
      %c0_16 = arith.constant 0 : index
      %40 = vector.load %arg6[%c0_15, %c0_16] : memref<8x128xf32, #tpu.memory_space<vmem>>, vector<8x128xf32>
      %41 = vector.shape_cast %37 : vector<16x128xf32> to vector<2x8x128xf32>
      %cst_17 = arith.constant dense<0.000000e+00> : vector<8x128xf32>
      %42 = vector.multi_reduction <add>, %41, %cst_17 [0] : vector<2x8x128xf32> to vector<8x128xf32>
      %43 = arith.addf %40, %42 : vector<8x128xf32>
      %c0_18 = arith.constant 0 : index
      %c0_19 = arith.constant 0 : index
      %44 = vector.load %arg6[%c0_18, %c0_19] : memref<8x128xf32, #tpu.memory_space<vmem>>, vector<8x128xf32>
      tpu.vector_store %arg6[%c0_18, %c0_19], %43 {strides = array<i32>} : memref<8x128xf32, #tpu.memory_space<vmem>>, vector<8x128xf32>,
      %c0_20 = arith.constant 0 : index
      %c0_21 = arith.constant 0 : index
      %45 = vector.load %arg7[%c0_20, %c0_21] : memref<8x128xf32, #tpu.memory_space<vmem>>, vector<8x128xf32>
      %46 = vector.shape_cast %39 : vector<16x128xf32> to vector<2x8x128xf32>
      %cst_22 = arith.constant dense<0.000000e+00> : vector<8x128xf32>
      %47 = vector.multi_reduction <add>, %46, %cst_22 [0] : vector<2x8x128xf32> to vector<8x128xf32>
      %48 = arith.addf %45, %47 : vector<8x128xf32>
      %c0_23 = arith.constant 0 : index
      %c0_24 = arith.constant 0 : index
      %49 = vector.load %arg7[%c0_23, %c0_24] : memref<8x128xf32, #tpu.memory_space<vmem>>, vector<8x128xf32>
      tpu.vector_store %arg7[%c0_23, %c0_24], %48 {strides = array<i32>} : memref<8x128xf32, #tpu.memory_space<vmem>>, vector<8x128xf32>,
    } else {
    }
    %c0_i32_5 = arith.constant 0 : i32
    %13 = arith.cmpi eq, %arg1, %c0_i32_5 : i32
    %14 = arith.extui %13 : i1 to i32
    %c0_i32_6 = arith.constant 0 : i32
    %15 = arith.cmpi ne, %14, %c0_i32_6 : i32
    scf.if %15 {
      %c0 = arith.constant 0 : index
      %c0_7 = arith.constant 0 : index
      %16 = vector.load %arg6[%c0, %c0_7] : memref<8x128xf32, #tpu.memory_space<vmem>>, vector<8x128xf32>
      %17 = vector.shape_cast %16 : vector<8x128xf32> to vector<1x8x128xf32>
      %c0_8 = arith.constant 0 : index
      %c0_9 = arith.constant 0 : index
      %c0_10 = arith.constant 0 : index
      %18 = vector.load %arg4[%c0_8, %c0_9, %c0_10] : memref<1x8x128xf32, #tpu.memory_space<vmem>>, vector<1x8x128xf32>
      tpu.vector_store %arg4[%c0_8, %c0_9, %c0_10], %17 {strides = array<i32>} : memref<1x8x128xf32, #tpu.memory_space<vmem>>, vector<1x8x128xf32>,
      %c0_11 = arith.constant 0 : index
      %c0_12 = arith.constant 0 : index
      %19 = vector.load %arg7[%c0_11, %c0_12] : memref<8x128xf32, #tpu.memory_space<vmem>>, vector<8x128xf32>
      %20 = vector.shape_cast %19 : vector<8x128xf32> to vector<1x8x128xf32>
      %c0_13 = arith.constant 0 : index
      %c0_14 = arith.constant 0 : index
      %c0_15 = arith.constant 0 : index
      %21 = vector.load %arg5[%c0_13, %c0_14, %c0_15] : memref<1x8x128xf32, #tpu.memory_space<vmem>>, vector<1x8x128xf32>
      tpu.vector_store %arg5[%c0_13, %c0_14, %c0_15], %20 {strides = array<i32>} : memref<1x8x128xf32, #tpu.memory_space<vmem>>, vector<1x8x128xf32>,
    } else {
    }
    return
  }
  func.func @transform_0(%arg0: i32, %arg1: i32) -> (i32, i32) {
    %c1_i32 = arith.constant 1 : i32
    %0 = arith.muli %arg0, %c1_i32 : i32
    %1 = arith.addi %0, %arg1 : i32
    %c0_i32 = arith.constant 0 : i32
    %c0_i32_0 = arith.constant 0 : i32
    return %1, %c0_i32 : i32, i32
  }
  func.func @transform_1(%arg0: i32, %arg1: i32) -> (i32, i32) {
    %c1_i32 = arith.constant 1 : i32
    %0 = arith.muli %arg0, %c1_i32 : i32
    %1 = arith.addi %0, %arg1 : i32
    %c0_i32 = arith.constant 0 : i32
    %c0_i32_0 = arith.constant 0 : i32
    return %1, %c0_i32 : i32, i32
  }
  func.func @transform_2(%arg0: i32, %arg1: i32) -> (i32, i32, i32) {
    %c0_i32 = arith.constant 0 : i32
    %c0_i32_0 = arith.constant 0 : i32
    %c0_i32_1 = arith.constant 0 : i32
    return %arg0, %c0_i32, %c0_i32_0 : i32, i32, i32
  }
  func.func @transform_3(%arg0: i32, %arg1: i32) -> (i32, i32, i32) {
    %c0_i32 = arith.constant 0 : i32
    %c0_i32_0 = arith.constant 0 : i32
    %c0_i32_1 = arith.constant 0 : i32
    return %arg0, %c0_i32, %c0_i32_0 : i32, i32, i32
  }
}

</mosaic_0001>

<llo_original>
// kernel: tpu_custom_call.1
$region0: #{tpu_custom_call.1}
  #allocation0 [shape = 'u32[]', space=smem, size = 0x4, offset = 0x4, fixed_abs, tag = 'smem constant byte address 0x4 - core index']
  #allocation1 [shape = 'u32[144,128]{1,0:T(1,128)}', space=vmem, size = 0x12000, scoped, tag = 'internal scratch']
  #allocation2 [shape = 'f32[8,128]{1,0:T(8,128)}', space=vmem, size = 0x1000, scoped, tag = 'scratch operand']
  #allocation3 [shape = 'f32[8,128]{1,0:T(8,128)}', space=vmem, size = 0x1000, scoped, tag = 'scratch operand']
  %s0 = inlined_call_operand.hbm [shape: f32[16,128], index: 0, kind: input, shape index: {}]
  %s1 = inlined_call_operand.hbm [shape: f32[16,128], index: 1, kind: input, shape index: {}]
  %s2 = inlined_call_operand.hbm [shape: f32[1,8,128], index: 2, kind: output, shape index: {0}]
  %s3 = inlined_call_operand.hbm [shape: f32[1,8,128], index: 3, kind: output, shape index: {1}]
  %4 = xla_tuple %s2, %s3
  %s5 = sld [smem:[#allocation0]]
  $region50: #{tpu_custom_call.1} parent=0
    _
  %s7 = ssub.s32 1, %s5
  %s8 = scalar_select 0, %s7, %s5
  $region1: #{tpu_custom_call.1} parent=0
    #allocation4 [shape = 'u8[8192]{0}', space=vmem, size = 0x2000, scoped, tag = 'input window, operand 0, single buffered']
    #allocation5 [shape = 's32[1]{0}', space=sflag, size = 0x4, scoped, tag = 'scoped memory for tpu_custom_call.1']
    #allocation6 [shape = 's32[1]{0}', space=sflag, size = 0x4, scoped, tag = 'scoped memory for tpu_custom_call.1']
    #allocation7 [shape = 'u8[8192]{0}', space=vmem, size = 0x2000, scoped, tag = 'input window, operand 1, single buffered']
    #allocation8 [shape = 's32[1]{0}', space=sflag, size = 0x4, scoped, tag = 'scoped memory for tpu_custom_call.1']
    #allocation9 [shape = 'u8[4096]{0}', space=vmem, size = 0x1000, scoped, tag = 'output window, operand 0, single buffered']
    #allocation10 [shape = 'u8[4096]{0}', space=vmem, size = 0x1000, scoped, tag = 'output window, operand 1, single buffered']
    #allocation11 [shape = 's32[1]{0}', space=sflag, size = 0x4, scoped, tag = 'scoped memory for tpu_custom_call.1']
    %9 = vsyncpa [#allocation5], 0
    %10 = vsyncpa [#allocation8], 0
    %11 = vsyncpa [#allocation6], 0
    %12 = vsyncpa [#allocation11], 0
    // Predicated region
    $region2: #{tpu_custom_call.1} parent=1 // pred_check
      _
    $region3: #{tpu_custom_call.1} parent=1 // pred_check_branch
      %14 = sbr.rel (0) target = $region5
    $region4: #{tpu_custom_call.1} parent=1 // pred_region
      %s15 = sadd.s32 0, 0
      %s16 = smul.u32 2, %s15
      %s18 = ssub.s32 256, 256
      %19 = vsyncadd [#allocation5], %s18
      %s20 = smul.addr %s16, 128
      %s21 = scalar_lea.hbm %s0, %s20
      %s22 = sshll.u32 [#allocation4], 4
      %s23 = int_to_ptr.vmem [resolvable:$true] %s22
      %28 = dma.hbm_to_vmem [thread:$0]  %s21, 256, %s23, [#allocation5], 128, 128, 8
    $region5: #{tpu_custom_call.1} parent=1 // pred_fallthru
      _
    // Predicated region
    $region6: #{tpu_custom_call.1} parent=1 // pred_check
      _
    $region7: #{tpu_custom_call.1} parent=1 // pred_check_branch
      %30 = sbr.rel (0) target = $region9
    $region8: #{tpu_custom_call.1} parent=1 // pred_region
      %s31 = sadd.s32 0, 0
      %s32 = smul.u32 2, %s31
      %s34 = ssub.s32 256, 256
      %35 = vsyncadd [#allocation8], %s34
      %s36 = smul.addr %s32, 128
      %s37 = scalar_lea.hbm %s1, %s36
      %s38 = sshll.u32 [#allocation7], 4
      %s39 = int_to_ptr.vmem [resolvable:$true] %s38
      %44 = dma.hbm_to_vmem [thread:$0]  %s37, 256, %s39, [#allocation8], 128, 128, 8
    $region9: #{tpu_custom_call.1} parent=1 // pred_fallthru
      _
    // Predicated region
    $region10: #{tpu_custom_call.1} parent=1 // pred_check
      _
    $region11: #{tpu_custom_call.1} parent=1 // pred_check_branch
      %46 = sbr.rel (0) target = $region13
    $region12: #{tpu_custom_call.1} parent=1 // pred_region
      %47 = dma.done [#allocation5], 256
    $region13: #{tpu_custom_call.1} parent=1 // pred_fallthru
      _
    // Predicated region
    $region14: #{tpu_custom_call.1} parent=1 // pred_check
      _
    $region15: #{tpu_custom_call.1} parent=1 // pred_check_branch
      %49 = sbr.rel (0) target = $region17
    $region16: #{tpu_custom_call.1} parent=1 // pred_region
      %50 = dma.done [#allocation8], 256
    $region17: #{tpu_custom_call.1} parent=1 // pred_fallthru
      _
    %s51 = sadd.s32 0, 0
    %s52 = smul.u32 2, %s51
    %s53 = sadd.s32 0, 0
    %s54 = smul.u32 2, %s53
    %p55 = scmp.eq.s32.totalorder 0, 0
    // Predicated region
    $region18: #{tpu_custom_call.1} parent=1 // pred_check
      %p56 = pneg %p55
    $region19: #{tpu_custom_call.1} parent=1 // pred_check_branch
      %58 = sbr.rel (%p56) target = $region21
    $region20: #{tpu_custom_call.1} parent=1 // pred_region
      %59 = vst [vmem:[#allocation2] sm:$0xff] 0.0
      %60 = vst [vmem:[#allocation3] sm:$0xff] 0.0
    $region21: #{tpu_custom_call.1} parent=1 // pred_fallthru
      _
    %s61 = sadd.s32 0, 0
    %s62 = smul.u32 %s61, 2048
    %s63 = sadd.s32 %s62, 2048
    %p64 = scmp.le.s32.totalorder %s63, 2048
    // Predicated region
    $region22: #{tpu_custom_call.1} parent=1 // pred_check
      %p65 = pneg %p64
    $region23: #{tpu_custom_call.1} parent=1 // pred_check_branch
      %67 = sbr.rel (%p65) target = $region25
    $region24: #{tpu_custom_call.1} parent=1 // pred_region
      %v68 = vld [vmem:[#allocation4] sm:$0xff]
      %v69 = vld [vmem:[#allocation4 + $0x8] sm:$0xff]
      %v70 = vld [vmem:[#allocation7] sm:$0xff]
      %v71 = vld [vmem:[#allocation7 + $0x8] sm:$0xff]
      %v72 = vmul.f32 %v68, 0.5
      %v73 = vmul.f32 %v69, 0.5
      %v74 = vtanh.pop %v72
      %v75 = vtanh.pop %v73
      %v76 = vadd.f32 %v74, 1.0
      %v77 = vadd.f32 %v75, 1.0
      %v78 = vmul.f32 %v76, 0.5
      %v79 = vmul.f32 %v77, 0.5
      %v80 = vmul.f32 %v78, %v70
      %v81 = vmul.f32 %v79, %v71
      %v82 = vadd.f32 %v78, %v70
      %v83 = vadd.f32 %v79, %v71
      %v84 = vld [vmem:[#allocation2] sm:$0xff]
      %v85 = vadd.f32 %v80, %v81
      %v86 = vadd.f32 %v84, %v85
      %87 = vst [vmem:[#allocation2] sm:$0xff] %v86
      %v88 = vld [vmem:[#allocation3] sm:$0xff]
      %v89 = vadd.f32 %v82, %v83
      %v90 = vadd.f32 %v88, %v89
      %91 = vst [vmem:[#allocation3] sm:$0xff] %v90
    $region25: #{tpu_custom_call.1} parent=1 // pred_fallthru
      _
    %p92 = scmp.gt.s32.totalorder %s63, 2048
    // Predicated region
    $region26: #{tpu_custom_call.1} parent=1 // pred_check
      %p93 = pneg %p92
    $region27: #{tpu_custom_call.1} parent=1 // pred_check_branch
      %95 = sbr.rel (%p93) target = $region29
    $region28: #{tpu_custom_call.1} parent=1 // pred_region
      %v96 = vld [vmem:[#allocation4] sm:$0xff]
      %v97 = vld [vmem:[#allocation4 + $0x8] sm:$0xff]
      %v98 = vld [vmem:[#allocation7] sm:$0xff]
      %v99 = vld [vmem:[#allocation7 + $0x8] sm:$0xff]
      %v100 = vmul.f32 %v96, 0.5
      %v101 = vmul.f32 %v97, 0.5
      %v102 = vtanh.pop %v100
      %v103 = vtanh.pop %v101
      %v104 = vadd.f32 %v102, 1.0
      %v105 = vadd.f32 %v103, 1.0
      %v106 = vmul.f32 %v104, 0.5
      %v107 = vmul.f32 %v105, 0.5
      %v108 = vmul.f32 %v106, %v98
      %v109 = vmul.f32 %v107, %v99
      %v110 = vadd.f32 %v106, %v98
      %v111 = vadd.f32 %v107, %v99
      %v112 = vlaneseq
      %v113 = vshrl.u32 %v112, 7
      %v114 = vadd.s32 %v113, 8
      %v115 = vlaneseq
      %v116 = vand.u32 %v115, 127
      %v117 = vmul.u32 %v113, 128
      %v118 = vmul.u32 %v114, 128
      %v119 = vstv %s62
      %v120 = vadd.s32 %v119, %v117
      %v121 = vadd.s32 %v119, %v118
      %v122 = vadd.s32 %v120, %v116
      %v123 = vadd.s32 %v121, %v116
      %vm124 = vcmp.lt.s32.totalorder %v122, 2048
      %vm125 = vcmp.lt.s32.totalorder %v123, 2048
      %v126 = vsel %vm124, %v108, 0.0
      %v127 = vsel %vm125, %v109, 0.0
      %v128 = vsel %vm124, %v110, 0.0
      %v129 = vsel %vm125, %v111, 0.0
      %v130 = vld [vmem:[#allocation2] sm:$0xff]
      %v131 = vadd.f32 %v126, %v127
      %v132 = vadd.f32 %v130, %v131
      %133 = vst [vmem:[#allocation2] sm:$0xff] %v132
      %v134 = vld [vmem:[#allocation3] sm:$0xff]
      %v135 = vadd.f32 %v128, %v129
      %v136 = vadd.f32 %v134, %v135
      %137 = vst [vmem:[#allocation3] sm:$0xff] %v136
    $region29: #{tpu_custom_call.1} parent=1 // pred_fallthru
      _
    // Predicated region
    $region30: #{tpu_custom_call.1} parent=1 // pred_check
      %p138 = pneg %p55
    $region31: #{tpu_custom_call.1} parent=1 // pred_check_branch
      %140 = sbr.rel (%p138) target = $region33
    $region32: #{tpu_custom_call.1} parent=1 // pred_region
      %v141 = vld [vmem:[#allocation2] sm:$0xff]
      %142 = vst [vmem:[#allocation9] sm:$0xff] %v141
      %v143 = vld [vmem:[#allocation3] sm:$0xff]
      %144 = vst [vmem:[#allocation10] sm:$0xff] %v143
    $region33: #{tpu_custom_call.1} parent=1 // pred_fallthru
      _
    // Predicated region
    $region34: #{tpu_custom_call.1} parent=1 // pred_check
      _
    $region35: #{tpu_custom_call.1} parent=1 // pred_check_branch
      %146 = sbr.rel (0) target = $region37
    $region36: #{tpu_custom_call.1} parent=1 // pred_region
      %s148 = ssub.s32 128, 128
      %149 = vsyncadd [#allocation6], %s148
      %s151 = sshll.u32 [#allocation9], 4
      %s152 = int_to_ptr.vmem [resolvable:$true] %s151
      %154 = dma.vmem_to_hbm [thread:$0]  %s152, 128, %s2, [#allocation6]
    $region37: #{tpu_custom_call.1} parent=1 // pred_fallthru
      _
    // Predicated region
    $region38: #{tpu_custom_call.1} parent=1 // pred_check
      _
    $region39: #{tpu_custom_call.1} parent=1 // pred_check_branch
      %156 = sbr.rel (0) target = $region41
    $region40: #{tpu_custom_call.1} parent=1 // pred_region
      %s158 = ssub.s32 128, 128
      %159 = vsyncadd [#allocation11], %s158
      %s161 = sshll.u32 [#allocation10], 4
      %s162 = int_to_ptr.vmem [resolvable:$true] %s161
      %164 = dma.vmem_to_hbm [thread:$0]  %s162, 128, %s3, [#allocation11]
    $region41: #{tpu_custom_call.1} parent=1 // pred_fallthru
      _
    // Predicated region
    $region42: #{tpu_custom_call.1} parent=1 // pred_check
      _
    $region43: #{tpu_custom_call.1} parent=1 // pred_check_branch
      %166 = sbr.rel (0) target = $region45
    $region44: #{tpu_custom_call.1} parent=1 // pred_region
      %167 = dma.done [#allocation6], 128
    $region45: #{tpu_custom_call.1} parent=1 // pred_fallthru
      _
    // Predicated region
    $region46: #{tpu_custom_call.1} parent=1 // pred_check
      _
    $region47: #{tpu_custom_call.1} parent=1 // pred_check_branch
      %169 = sbr.rel (0) target = $region49
    $region48: #{tpu_custom_call.1} parent=1 // pred_region
      %170 = dma.done [#allocation11], 128
    $region49: #{tpu_custom_call.1} parent=1 // pred_fallthru
      _
    %171 = vsyncpa [#allocation5], 1
    %172 = vsyncpa [#allocation8], 1
    %173 = vsyncpa [#allocation6], 1
    %174 = vsyncpa [#allocation11], 1

</llo_original>
